<compile_context>
chip_gen: v6e
topology: v6e:2x2x1
jax: 0.10.0
libtpu: 0.0.40
codegen_flags: <defaults>
</compile_context>

<pallas_src>
import functools

import jax
import jax.numpy as jnp
from jax.experimental import pallas as pl
from jax.experimental.pallas import tpu as pltpu


def _ia_kernel(img_ref, pt_ref, w_img_ref, b_img_ref, w2_ref, w3_ref, b3_ref,
               o_ref):
  """One (batch, tn points) tile in NCW layout.

  img_ref:   (ic, tn)      pt_ref: (pc, tn)
  w_img_ref: (pc+rc, ic)   = concat([BN-folded conv weight, fc1 weight])
  b_img_ref: (pc+rc, 1)    = concat([BN-folded conv bias,   b1 + b2])
  w2_ref:    (rc, pc)      w3_ref: (1, rc)   b3_ref: (1, 1)
  o_ref:     (pc, tn)
  """
  pc = o_ref.shape[0]

  img = img_ref[...]                                   # (ic, tn)
  pt = pt_ref[...]                                     # (pc, tn)

  # One MXU pass covers both the 1x1 conv (+BN) and fc1 (shared ic contraction).
  fused = jnp.dot(w_img_ref[...], img,
                  preferred_element_type=jnp.float32) + b_img_ref[...]
  feat = fused[:pc, :]                                 # conv+BN output (pc, tn)
  ri = fused[pc:, :]                                   # fc1 + (b1+b2)  (rc, tn)

  rp = jnp.dot(w2_ref[...], pt,
               preferred_element_type=jnp.float32)     # fc2 (bias already in ri)
  t = jnp.tanh(ri + rp)                                # (rc, tn)

  logit = jnp.dot(w3_ref[...], t,
                  preferred_element_type=jnp.float32) + b3_ref[...]   # (1, tn)
  att = jax.nn.sigmoid(logit)                          # (1, tn)

  feat = jnp.maximum(feat, 0.0)                        # ReLU
  o_ref[...] = (feat * att).astype(o_ref.dtype)        # broadcast att over pc


@functools.partial(jax.jit, static_argnames=("tn",))
def ia_layer_forward(img_feas, point_feas, params, *, tn=1024):
  """img_feas: (B, ic, N) f32, point_feas: (B, pc, N) f32 -> (B, pc, N) f32."""
  B, ic, N = img_feas.shape
  pc = point_feas.shape[1]
  rc = params["w1"].shape[0]

  tn = min(tn, N)
  assert N % tn == 0 and (tn == N or tn % 128 == 0), (
      "N must be a multiple of the point tile (and tile a multiple of 128)")

  # --- fold BatchNorm (inference mode) into the 1x1-conv weight & bias ---
  eps = 1e-5
  bn_scale = params["bn_gamma"] / jnp.sqrt(params["bn_var"] + eps)   # (pc,)
  bn_shift = params["bn_beta"] - params["bn_mean"] * bn_scale        # (pc,)
  wc_folded = params["wc"] * bn_scale[:, None]                       # (pc, ic)
  bc_folded = params["bc"] * bn_scale + bn_shift                     # (pc,)

  # --- fuse conv(+BN) with fc1 (both contract over ic), fold b1+b2 ---
  w_img = jnp.concatenate([wc_folded, params["w1"]], axis=0)         # (pc+rc, ic)
  b_img = jnp.concatenate([bc_folded, params["b1"] + params["b2"]],
                          axis=0)[:, None]                           # (pc+rc, 1)
  w2 = params["w2"]                                                  # (rc, pc)
  w3 = params["w3"]                                                  # (1, rc)
  b3 = params["b3"].reshape(1, 1)                                    # (1, 1)

  full = lambda a: pl.BlockSpec(a.shape, lambda b, j: (0, 0))

  out = pl.pallas_call(
      _ia_kernel,
      out_shape=jax.ShapeDtypeStruct((B, pc, N), jnp.float32),
      grid_spec=pltpu.PrefetchScalarGridSpec(
          num_scalar_prefetch=0,
          grid=(B, N // tn),
          in_specs=[
              pl.BlockSpec((None, ic, tn), lambda b, j: (b, 0, j)),   # img tile
              pl.BlockSpec((None, pc, tn), lambda b, j: (b, 0, j)),   # point tile
              full(w_img), full(b_img), full(w2), full(w3), full(b3),
          ],
          out_specs=pl.BlockSpec((None, pc, tn), lambda b, j: (b, 0, j)),
      ),
      compiler_params=pltpu.CompilerParams(
          dimension_semantics=("parallel", "parallel")),
  )(img_feas, point_feas, w_img, b_img, w2, w3, b3)
  return out


def _reference(img_feas, point_feas, params):
  """Pure-JAX reference matching the PyTorch forward (BN in inference mode)."""
  B, ic, N = img_feas.shape
  pc = point_feas.shape[1]
  img_f = jnp.transpose(img_feas, (0, 2, 1)).reshape(-1, ic)
  pt_f = jnp.transpose(point_feas, (0, 2, 1)).reshape(-1, pc)
  ri = img_f @ params["w1"].T + params["b1"]
  rp = pt_f @ params["w2"].T + params["b2"]
  att = jax.nn.sigmoid(jnp.tanh(ri + rp) @ params["w3"].T + params["b3"])
  att = att.reshape(B, 1, N)
  conv = jnp.einsum("oc,bcn->bon", params["wc"], img_feas) + params["bc"][None, :, None]
  bn = (conv - params["bn_mean"][None, :, None]) / jnp.sqrt(
      params["bn_var"][None, :, None] + 1e-5)
  bn = bn * params["bn_gamma"][None, :, None] + params["bn_beta"][None, :, None]
  return jnp.maximum(bn, 0.0) * att


def make_params(key, ic, pc):
  rc = pc // 4
  ks = jax.random.split(key, 8)
  sc = 0.1
  return {
      "wc": sc * jax.random.normal(ks[0], (pc, ic), jnp.float32),
      "bc": sc * jax.random.normal(ks[1], (pc,), jnp.float32),
      "bn_gamma": 1.0 + sc * jax.random.normal(ks[2], (pc,), jnp.float32),
      "bn_beta": sc * jax.random.normal(ks[3], (pc,), jnp.float32),
      "bn_mean": sc * jax.random.normal(ks[4], (pc,), jnp.float32),
      "bn_var": jnp.abs(1.0 + sc * jax.random.normal(ks[5], (pc,), jnp.float32)),
      "w1": sc * jax.random.normal(ks[6], (rc, ic), jnp.float32),
      "b1": jnp.zeros((rc,), jnp.float32),
      "w2": sc * jax.random.normal(ks[7], (rc, pc), jnp.float32),
      "b2": jnp.zeros((rc,), jnp.float32),
      "w3": sc * jax.random.normal(jax.random.fold_in(key, 99), (1, rc), jnp.float32),
      "b3": jnp.zeros((1,), jnp.float32),
  }


if __name__ == "__main__":
  key = jax.random.PRNGKey(0)
  B, ic, pc, N = 2, 32, 64, 256          # channels=(ic, pc), rc = pc//4 = 16
  k_img, k_pt, k_par = jax.random.split(key, 3)
  img_feas = jax.random.normal(k_img, (B, ic, N), jnp.float32)
  point_feas = jax.random.normal(k_pt, (B, pc, N), jnp.float32)
  params = make_params(k_par, ic, pc)

  out = ia_layer_forward(img_feas, point_feas, params)
  out = jax.block_until_ready(out)

  ref = _reference(img_feas, point_feas, params)
  assert out.shape == (B, pc, N)
  assert jnp.allclose(out, ref, atol=1e-4, rtol=1e-4), "mismatch vs reference"
  print("KERNEL_OK")
</pallas_src>

<mosaic_0001>
module attributes {stable_mosaic.version = 11 : i64} {
  func.func @_ia_kernel(%arg0: i32, %arg1: i32, %arg2: memref<1x32x256xf32, #tpu.memory_space<vmem>>, %arg3: memref<1x64x256xf32, #tpu.memory_space<vmem>>, %arg4: memref<80x32xf32, #tpu.memory_space<vmem>>, %arg5: memref<80x1xf32, #tpu.memory_space<vmem>>, %arg6: memref<16x64xf32, #tpu.memory_space<vmem>>, %arg7: memref<1x16xf32, #tpu.memory_space<vmem>>, %arg8: memref<1x1xf32, #tpu.memory_space<vmem>>, %arg9: memref<1x64x256xf32, #tpu.memory_space<vmem>>) attributes {dimension_semantics = [#tpu.dimension_semantics<parallel>, #tpu.dimension_semantics<parallel>], iteration_bounds = array<i64: 2, 1>, scalar_prefetch = 0 : i64, scratch_operands = 0 : i64, tpu.core_type = #tpu.core_type<tc>, window_params = [{transform_indices = @transform_0, window_bounds = array<i64: 1, 32, 256>}, {transform_indices = @transform_1, window_bounds = array<i64: 1, 64, 256>}, {pipeline_mode = #tpu.pipeline_mode<synchronous>, transform_indices = @transform_2, window_bounds = array<i64: 80, 32>}, {pipeline_mode = #tpu.pipeline_mode<synchronous>, transform_indices = @transform_3, window_bounds = array<i64: 80, 1>}, {pipeline_mode = #tpu.pipeline_mode<synchronous>, transform_indices = @transform_4, window_bounds = array<i64: 16, 64>}, {pipeline_mode = #tpu.pipeline_mode<synchronous>, transform_indices = @transform_5, window_bounds = array<i64: 1, 16>}, {pipeline_mode = #tpu.pipeline_mode<synchronous>, transform_indices = @transform_6, window_bounds = array<i64: 1, 1>}, {transform_indices = @transform_7, window_bounds = array<i64: 1, 64, 256>}]} {
    %c0 = arith.constant 0 : index
    %c0_0 = arith.constant 0 : index
    %c0_1 = arith.constant 0 : index
    %0 = vector.load %arg2[%c0, %c0_0, %c0_1] : memref<1x32x256xf32, #tpu.memory_space<vmem>>, vector<1x32x256xf32>
    %1 = vector.shape_cast %0 : vector<1x32x256xf32> to vector<32x256xf32>
    %c0_2 = arith.constant 0 : index
    %c0_3 = arith.constant 0 : index
    %c0_4 = arith.constant 0 : index
    %2 = vector.load %arg3[%c0_2, %c0_3, %c0_4] : memref<1x64x256xf32, #tpu.memory_space<vmem>>, vector<1x64x256xf32>
    %3 = vector.shape_cast %2 : vector<1x64x256xf32> to vector<64x256xf32>
    %c0_5 = arith.constant 0 : index
    %c0_6 = arith.constant 0 : index
    %4 = vector.load %arg4[%c0_5, %c0_6] : memref<80x32xf32, #tpu.memory_space<vmem>>, vector<80x32xf32>
    %cst = arith.constant dense<0.000000e+00> : vector<80x256xf32>
    %5 = tpu.matmul %4, %1, %cst {dimension_numbers = #tpu.dot_dimension_numbers<[1], [0], [0], [1], [0, 0, 1, 1], [], []>} : vector<80x32xf32>, vector<32x256xf32>, vector<80x256xf32> -> vector<80x256xf32>
    %c0_7 = arith.constant 0 : index
    %c0_8 = arith.constant 0 : index
    %6 = vector.load %arg5[%c0_7, %c0_8] : memref<80x1xf32, #tpu.memory_space<vmem>>, vector<80x1xf32>
    %7 = vector.broadcast %6 : vector<80x1xf32> to vector<80x256xf32>
    %8 = arith.addf %5, %7 : vector<80x256xf32>
    %9 = vector.extract_strided_slice %8 {offsets = [0, 0], sizes = [64, 256], strides = [1, 1]} : vector<80x256xf32> to vector<64x256xf32>
    %10 = vector.extract_strided_slice %8 {offsets = [64, 0], sizes = [16, 256], strides = [1, 1]} : vector<80x256xf32> to vector<16x256xf32>
    %c0_9 = arith.constant 0 : index
    %c0_10 = arith.constant 0 : index
    %11 = vector.load %arg6[%c0_9, %c0_10] : memref<16x64xf32, #tpu.memory_space<vmem>>, vector<16x64xf32>
    %cst_11 = arith.constant dense<0.000000e+00> : vector<16x256xf32>
    %12 = tpu.matmul %11, %3, %cst_11 {dimension_numbers = #tpu.dot_dimension_numbers<[1], [0], [0], [1], [0, 0, 1, 1], [], []>} : vector<16x64xf32>, vector<64x256xf32>, vector<16x256xf32> -> vector<16x256xf32>
    %13 = arith.addf %10, %12 : vector<16x256xf32>
    %14 = math.tanh %13 : vector<16x256xf32>
    %c0_12 = arith.constant 0 : index
    %c0_13 = arith.constant 0 : index
    %15 = vector.load %arg7[%c0_12, %c0_13] : memref<1x16xf32, #tpu.memory_space<vmem>>, vector<1x16xf32>
    %cst_14 = arith.constant dense<0.000000e+00> : vector<1x256xf32>
    %16 = tpu.matmul %15, %14, %cst_14 {dimension_numbers = #tpu.dot_dimension_numbers<[1], [0], [0], [1], [0, 0, 1, 1], [], []>} : vector<1x16xf32>, vector<16x256xf32>, vector<1x256xf32> -> vector<1x256xf32>
    %c0_15 = arith.constant 0 : index
    %c0_16 = arith.constant 0 : index
    %17 = vector.load %arg8[%c0_15, %c0_16] : memref<1x1xf32, #tpu.memory_space<vmem>>, vector<1x1xf32>
    %18 = vector.broadcast %17 : vector<1x1xf32> to vector<1x256xf32>
    %19 = arith.addf %16, %18 : vector<1x256xf32>
    %20 = arith.negf %19 : vector<1x256xf32>
    %21 = math.exp %20 : vector<1x256xf32>
    %cst_17 = arith.constant 1.000000e+00 : f32
    %22 = vector.broadcast %cst_17 : f32 to vector<1x256xf32>
    %23 = arith.addf %22, %21 : vector<1x256xf32>
    %24 = arith.divf %22, %23 : vector<1x256xf32>
    %cst_18 = arith.constant 0.000000e+00 : f32
    %25 = vector.broadcast %cst_18 : f32 to vector<64x256xf32>
    %26 = arith.maximumf %9, %25 : vector<64x256xf32>
    %27 = vector.broadcast %24 : vector<1x256xf32> to vector<64x256xf32>
    %28 = arith.mulf %26, %27 : vector<64x256xf32>
    %c0_19 = arith.constant 0 : index
    %c0_20 = arith.constant 0 : index
    %c0_21 = arith.constant 0 : index
    %29 = vector.load %arg9[%c0_19, %c0_20, %c0_21] : memref<1x64x256xf32, #tpu.memory_space<vmem>>, vector<1x64x256xf32>
    %30 = vector.shape_cast %29 : vector<1x64x256xf32> to vector<64x256xf32>
    %31 = vector.shape_cast %28 : vector<64x256xf32> to vector<1x64x256xf32>
    tpu.vector_store %arg9[%c0_19, %c0_20, %c0_21], %31 {strides = array<i32>} : memref<1x64x256xf32, #tpu.memory_space<vmem>>, vector<1x64x256xf32>,
    return
  }
  func.func @transform_0(%arg0: i32, %arg1: i32) -> (i32, i32, i32) {
    %c0_i32 = arith.constant 0 : i32
    %c0_i32_0 = arith.constant 0 : i32
    return %arg0, %c0_i32, %arg1 : i32, i32, i32
  }
  func.func @transform_1(%arg0: i32, %arg1: i32) -> (i32, i32, i32) {
    %c0_i32 = arith.constant 0 : i32
    %c0_i32_0 = arith.constant 0 : i32
    return %arg0, %c0_i32, %arg1 : i32, i32, i32
  }
  func.func @transform_2(%arg0: i32, %arg1: i32) -> (i32, i32) {
    %c0_i32 = arith.constant 0 : i32
    %c0_i32_0 = arith.constant 0 : i32
    %c0_i32_1 = arith.constant 0 : i32
    return %c0_i32, %c0_i32_0 : i32, i32
  }
  func.func @transform_3(%arg0: i32, %arg1: i32) -> (i32, i32) {
    %c0_i32 = arith.constant 0 : i32
    %c0_i32_0 = arith.constant 0 : i32
    %c0_i32_1 = arith.constant 0 : i32
    return %c0_i32, %c0_i32_0 : i32, i32
  }
  func.func @transform_4(%arg0: i32, %arg1: i32) -> (i32, i32) {
    %c0_i32 = arith.constant 0 : i32
    %c0_i32_0 = arith.constant 0 : i32
    %c0_i32_1 = arith.constant 0 : i32
    return %c0_i32, %c0_i32_0 : i32, i32
  }
  func.func @transform_5(%arg0: i32, %arg1: i32) -> (i32, i32) {
    %c0_i32 = arith.constant 0 : i32
    %c0_i32_0 = arith.constant 0 : i32
    %c0_i32_1 = arith.constant 0 : i32
    return %c0_i32, %c0_i32_0 : i32, i32
  }
  func.func @transform_6(%arg0: i32, %arg1: i32) -> (i32, i32) {
    %c0_i32 = arith.constant 0 : i32
    %c0_i32_0 = arith.constant 0 : i32
    %c0_i32_1 = arith.constant 0 : i32
    return %c0_i32, %c0_i32_0 : i32, i32
  }
  func.func @transform_7(%arg0: i32, %arg1: i32) -> (i32, i32, i32) {
    %c0_i32 = arith.constant 0 : i32
    %c0_i32_0 = arith.constant 0 : i32
    return %arg0, %c0_i32, %arg1 : i32, i32, i32
  }
}

</mosaic_0001>

<llo_original>
// kernel: ia_layer_forward.1
$region0: #{ia_layer_forward.1}
  #allocation0 [shape = 'u32[]', space=smem, size = 0x4, offset = 0x4, fixed_abs, tag = 'smem constant byte address 0x4 - core index']
  #allocation1 [shape = 'u32[144,128]{1,0:T(1,128)}', space=vmem, size = 0x12000, scoped, tag = 'internal scratch']
  #allocation2 [shape = 'f32[1,1]{1,0:T(1,128)S(1)}', space=vmem, size = 0x200, scoped, tag = 'scoped memory for ia_layer_forward.1']
  %s0 = inlined_call_operand.vmem [shape: f32[2,32,256], index: 0, kind: input, shape index: {}]
  %s1 = inlined_call_operand.vmem [shape: f32[2,64,256], index: 1, kind: input, shape index: {}]
  %s2 = inlined_call_operand.vmem [shape: f32[80,32], index: 2, kind: input, shape index: {}]
  %s3 = inlined_call_operand.vmem [shape: f32[80,1], index: 3, kind: input, shape index: {}]
  %s4 = inlined_call_operand.vmem [shape: f32[16,64], index: 4, kind: input, shape index: {}]
  %s5 = inlined_call_operand.vmem [shape: f32[1,16], index: 5, kind: input, shape index: {}]
  %s6 = inlined_call_operand.<no memory space> [shape: f32[1,1], index: 6, kind: input, shape index: {}]
  %s7 = inlined_call_operand.hbm [shape: f32[2,64,256], index: 7, kind: output, shape index: {}]
  %s8 = sld [smem:[#allocation0]]
  $region61: #{ia_layer_forward.1} parent=0
    _
  %s10 = ssub.s32 1, %s8
  %s11 = scalar_select 0, %s10, %s8
  %v12 = vstv %s6
  %13 = vst [vmem:[#allocation2] sm:$0x1] %v12
  $region1: #{ia_layer_forward.1} parent=0
    #allocation3 [shape = 'u8[131072]{0}', space=vmem, size = 0x20000, scoped, tag = 'output window, operand 0']
    #allocation4 [shape = 's32[2]{0}', space=sflag, size = 0x8, scoped, tag = 'scoped memory for ia_layer_forward.1']
    %14 = vsyncpa [#allocation4], 0
    %s15 = scalar_lea.sflag [#allocation4], 1
    %16 = vsyncpa %s15, 0
    loop: start=0, step=1, limit=4
    $region2: #{ia_layer_forward.1} parent=1 // loop_pre_header
      _
    $region3: #{ia_layer_forward.1} parent=1 // loop_header
      %s18 = sphi 0, %s22
      %p19 = scmp.ge.s32.totalorder %s18, 4
      %s25 = sphi 0, %s37
      %s26 = sphi 0, %s33
      %s27 = sphi 0, %s25
      %s28 = sphi 0, %s26
      %s29 = sphi 0, %s27
      %s30 = sphi 0, %s28
      %s42 = sphi 0, %s44
      %s45 = sphi 0, %s42
      %s46 = sphi 0, %s45
      %s62 = sphi 0, %s46
      %s70 = sphi 0, %s72
      %s73 = sphi 0, %s70
      %s74 = sphi 0, %s73
      %s90 = sphi 0, %s74
      %s94 = sphi 0, %s94
      %s96 = sphi 0, %s94
      %s97 = sphi 0, %s96
      %s111 = sphi 0, %s97
      %s115 = sphi 0, %s115
      %s117 = sphi 0, %s115
      %s118 = sphi 0, %s117
      %s132 = sphi 0, %s118
      %s136 = sphi 0, %s136
      %s138 = sphi 0, %s136
      %s139 = sphi 0, %s138
      %s153 = sphi 0, %s139
      %s157 = sphi 0, %s157
      %s159 = sphi 0, %s157
      %s160 = sphi 0, %s159
      %s174 = sphi 0, %s160
      %s178 = sphi 0, %s178
      %s180 = sphi 0, %s178
      %s181 = sphi 0, %s180
      %s195 = sphi 0, %s181
      %s203 = sphi 0, %s205
      %s206 = sphi 0, %s203
      %s207 = sphi 0, %s206
      %s223 = sphi 0, %s207
    $region4: #{ia_layer_forward.1} parent=1 // loop_header_branch
      %21 = sbr.rel (%p19) target = $region8
    $region5: #{ia_layer_forward.1} parent=1 // loop_body
      %s23 = ssub.s32 %s18, 1
      %s24 = ssub.s32 %s18, 2
      %s31 = sadd.s32 1, %s26
      %p32 = scmp.ge.s32.totalorder %s31, 1
      %s33 = scalar_select %p32, 0, %s31
      %s34 = sadd.s32 1, %s25
      %s35 = scalar_select %p32, %s34, %s25
      %p36 = scmp.ge.s32.totalorder %s35, 2
      %s37 = scalar_select %p36, 0, %s35
      %s38 = ssub.s32 %s25, %s37
      %s39 = ssub.s32 %s26, %s33
      %s40 = sor.u32 %s38, %s39
      %p41 = scmp.eq.s32.totalorder %s40, 0
      %s43 = sadd.s32 %s42, 1
      %s44 = scalar_select %p41, %s42, %s43
      %p47 = pneg %p41
      %p48 = scmp.eq.s32.totalorder %s18, 1
      %p49 = por %p47, %p48
      %p50 = scmp.ne.s32.totalorder %s42, %s45
      %p51 = scmp.eq.s32.totalorder %s18, 0
      %p52 = por %p50, %p51
      %p53 = scmp.ne.s32.totalorder %s42, %s45
      %p54 = scmp.eq.s32.totalorder %s23, 1
      %p55 = por %p53, %p54
      %p56 = scmp.ne.s32.totalorder %s45, %s46
      %p57 = scmp.eq.s32.totalorder %s23, 0
      %p58 = por %p56, %p57
      %p59 = scmp.ne.s32.totalorder %s45, %s46
      %p60 = scmp.eq.s32.totalorder %s24, 1
      %p61 = por %p59, %p60
      %p63 = scmp.ne.s32.totalorder %s46, %s62
      %p64 = scmp.eq.s32.totalorder %s24, 0
      %p65 = por %p63, %p64
      %s66 = ssub.s32 %s25, %s37
      %s67 = ssub.s32 %s26, %s33
      %s68 = sor.u32 %s66, %s67
      %p69 = scmp.eq.s32.totalorder %s68, 0
      %s71 = sadd.s32 %s70, 1
      %s72 = scalar_select %p69, %s70, %s71
      %p75 = pneg %p69
      %p76 = scmp.eq.s32.totalorder %s18, 1
      %p77 = por %p75, %p76
      %p78 = scmp.ne.s32.totalorder %s70, %s73
      %p79 = scmp.eq.s32.totalorder %s18, 0
      %p80 = por %p78, %p79
      %p81 = scmp.ne.s32.totalorder %s70, %s73
      %p82 = scmp.eq.s32.totalorder %s23, 1
      %p83 = por %p81, %p82
      %p84 = scmp.ne.s32.totalorder %s73, %s74
      %p85 = scmp.eq.s32.totalorder %s23, 0
      %p86 = por %p84, %p85
      %p87 = scmp.ne.s32.totalorder %s73, %s74
      %p88 = scmp.eq.s32.totalorder %s24, 1
      %p89 = por %p87, %p88
      %p91 = scmp.ne.s32.totalorder %s74, %s90
      %p92 = scmp.eq.s32.totalorder %s24, 0
      %p93 = por %p91, %p92
      %s95 = sadd.s32 %s94, 1
      %p98 = scmp.eq.s32.totalorder %s18, 1
      %p99 = scmp.ne.s32.totalorder %s94, %s96
      %p100 = scmp.eq.s32.totalorder %s18, 0
      %p101 = por %p99, %p100
      %p102 = scmp.ne.s32.totalorder %s94, %s96
      %p103 = scmp.eq.s32.totalorder %s23, 1
      %p104 = por %p102, %p103
      %p105 = scmp.ne.s32.totalorder %s96, %s97
      %p106 = scmp.eq.s32.totalorder %s23, 0
      %p107 = por %p105, %p106
      %p108 = scmp.ne.s32.totalorder %s96, %s97
      %p109 = scmp.eq.s32.totalorder %s24, 1
      %p110 = por %p108, %p109
      %p112 = scmp.ne.s32.totalorder %s97, %s111
      %p113 = scmp.eq.s32.totalorder %s24, 0
      %p114 = por %p112, %p113
      %s116 = sadd.s32 %s115, 1
      %p119 = scmp.eq.s32.totalorder %s18, 1
      %p120 = scmp.ne.s32.totalorder %s115, %s117
      %p121 = scmp.eq.s32.totalorder %s18, 0
      %p122 = por %p120, %p121
      %p123 = scmp.ne.s32.totalorder %s115, %s117
      %p124 = scmp.eq.s32.totalorder %s23, 1
      %p125 = por %p123, %p124
      %p126 = scmp.ne.s32.totalorder %s117, %s118
      %p127 = scmp.eq.s32.totalorder %s23, 0
      %p128 = por %p126, %p127
      %p129 = scmp.ne.s32.totalorder %s117, %s118
      %p130 = scmp.eq.s32.totalorder %s24, 1
      %p131 = por %p129, %p130
      %p133 = scmp.ne.s32.totalorder %s118, %s132
      %p134 = scmp.eq.s32.totalorder %s24, 0
      %p135 = por %p133, %p134
      %s137 = sadd.s32 %s136, 1
      %p140 = scmp.eq.s32.totalorder %s18, 1
      %p141 = scmp.ne.s32.totalorder %s136, %s138
      %p142 = scmp.eq.s32.totalorder %s18, 0
      %p143 = por %p141, %p142
      %p144 = scmp.ne.s32.totalorder %s136, %s138
      %p145 = scmp.eq.s32.totalorder %s23, 1
      %p146 = por %p144, %p145
      %p147 = scmp.ne.s32.totalorder %s138, %s139
      %p148 = scmp.eq.s32.totalorder %s23, 0
      %p149 = por %p147, %p148
      %p150 = scmp.ne.s32.totalorder %s138, %s139
      %p151 = scmp.eq.s32.totalorder %s24, 1
      %p152 = por %p150, %p151
      %p154 = scmp.ne.s32.totalorder %s139, %s153
      %p155 = scmp.eq.s32.totalorder %s24, 0
      %p156 = por %p154, %p155
      %s158 = sadd.s32 %s157, 1
      %p161 = scmp.eq.s32.totalorder %s18, 1
      %p162 = scmp.ne.s32.totalorder %s157, %s159
      %p163 = scmp.eq.s32.totalorder %s18, 0
      %p164 = por %p162, %p163
      %p165 = scmp.ne.s32.totalorder %s157, %s159
      %p166 = scmp.eq.s32.totalorder %s23, 1
      %p167 = por %p165, %p166
      %p168 = scmp.ne.s32.totalorder %s159, %s160
      %p169 = scmp.eq.s32.totalorder %s23, 0
      %p170 = por %p168, %p169
      %p171 = scmp.ne.s32.totalorder %s159, %s160
      %p172 = scmp.eq.s32.totalorder %s24, 1
      %p173 = por %p171, %p172
      %p175 = scmp.ne.s32.totalorder %s160, %s174
      %p176 = scmp.eq.s32.totalorder %s24, 0
      %p177 = por %p175, %p176
      %s179 = sadd.s32 %s178, 1
      %p182 = scmp.eq.s32.totalorder %s18, 1
      %p183 = scmp.ne.s32.totalorder %s178, %s180
      %p184 = scmp.eq.s32.totalorder %s18, 0
      %p185 = por %p183, %p184
      %p186 = scmp.ne.s32.totalorder %s178, %s180
      %p187 = scmp.eq.s32.totalorder %s23, 1
      %p188 = por %p186, %p187
      %p189 = scmp.ne.s32.totalorder %s180, %s181
      %p190 = scmp.eq.s32.totalorder %s23, 0
      %p191 = por %p189, %p190
      %p192 = scmp.ne.s32.totalorder %s180, %s181
      %p193 = scmp.eq.s32.totalorder %s24, 1
      %p194 = por %p192, %p193
      %p196 = scmp.ne.s32.totalorder %s181, %s195
      %p197 = scmp.eq.s32.totalorder %s24, 0
      %p198 = por %p196, %p197
      %s199 = ssub.s32 %s25, %s37
      %s200 = ssub.s32 %s26, %s33
      %s201 = sor.u32 %s199, %s200
      %p202 = scmp.eq.s32.totalorder %s201, 0
      %s204 = sadd.s32 %s203, 1
      %s205 = scalar_select %p202, %s203, %s204
      %p208 = pneg %p202
      %p209 = scmp.eq.s32.totalorder %s18, 1
      %p210 = por %p208, %p209
      %p211 = scmp.ne.s32.totalorder %s203, %s206
      %p212 = scmp.eq.s32.totalorder %s18, 0
      %p213 = por %p211, %p212
      %p214 = scmp.ne.s32.totalorder %s203, %s206
      %p215 = scmp.eq.s32.totalorder %s23, 1
      %p216 = por %p214, %p215
      %p217 = scmp.ne.s32.totalorder %s206, %s207
      %p218 = scmp.eq.s32.totalorder %s23, 0
      %p219 = por %p217, %p218
      %p220 = scmp.ne.s32.totalorder %s206, %s207
      %p221 = scmp.eq.s32.totalorder %s24, 1
      %p222 = por %p220, %p221
      %p224 = scmp.ne.s32.totalorder %s207, %s223
      %p225 = scmp.eq.s32.totalorder %s24, 0
      %p226 = por %p224, %p225
      %p227 = scmp.le.s32.totalorder 1, %s18
      %p228 = scmp.lt.s32.totalorder %s18, 3
      %p229 = pnand %p227, %p228
      %p230 = pneg %p229
      // Predicated region
      $region9: #{ia_layer_forward.1} parent=5 // pred_check
        _
      $region10: #{ia_layer_forward.1} parent=5 // pred_check_branch
        %232 = sbr.rel (%p229) target = $region12
      $region11: #{ia_layer_forward.1} parent=5 // pred_region
        %s233 = ssub.s32 %s18, 1
        // Predicated region
        $region13: #{ia_layer_forward.1} parent=11 // pred_check
          %p234 = pneg %p107
        $region14: #{ia_layer_forward.1} parent=11 // pred_check_branch
          %236 = sbr.rel (%p234) target = $region16
        $region15: #{ia_layer_forward.1} parent=11 // pred_region
          _
        $region16: #{ia_layer_forward.1} parent=11 // pred_fallthru
          _
        // Predicated region
        $region17: #{ia_layer_forward.1} parent=11 // pred_check
          %p237 = pneg %p128
        $region18: #{ia_layer_forward.1} parent=11 // pred_check_branch
          %239 = sbr.rel (%p237) target = $region20
        $region19: #{ia_layer_forward.1} parent=11 // pred_region
          _
        $region20: #{ia_layer_forward.1} parent=11 // pred_fallthru
          _
        // Predicated region
        $region21: #{ia_layer_forward.1} parent=11 // pred_check
          %p240 = pneg %p149
        $region22: #{ia_layer_forward.1} parent=11 // pred_check_branch
          %242 = sbr.rel (%p240) target = $region24
        $region23: #{ia_layer_forward.1} parent=11 // pred_region
          _
        $region24: #{ia_layer_forward.1} parent=11 // pred_fallthru
          _
        // Predicated region
        $region25: #{ia_layer_forward.1} parent=11 // pred_check
          %p243 = pneg %p170
        $region26: #{ia_layer_forward.1} parent=11 // pred_check_branch
          %245 = sbr.rel (%p243) target = $region28
        $region27: #{ia_layer_forward.1} parent=11 // pred_region
          _
        $region28: #{ia_layer_forward.1} parent=11 // pred_fallthru
          _
        // Predicated region
        $region29: #{ia_layer_forward.1} parent=11 // pred_check
          %p246 = pneg %p191
        $region30: #{ia_layer_forward.1} parent=11 // pred_check_branch
          %248 = sbr.rel (%p246) target = $region32
        $region31: #{ia_layer_forward.1} parent=11 // pred_region
          _
        $region32: #{ia_layer_forward.1} parent=11 // pred_fallthru
          _
      $region12: #{ia_layer_forward.1} parent=5 // pred_fallthru
        _
      %p249 = scmp.lt.s32.totalorder %s18, 2
      // Predicated region
      $region33: #{ia_layer_forward.1} parent=5 // pred_check
        %p250 = pneg %p249
      $region34: #{ia_layer_forward.1} parent=5 // pred_check_branch
        %252 = sbr.rel (%p250) target = $region36
      $region35: #{ia_layer_forward.1} parent=5 // pred_region
        // Predicated region
        $region37: #{ia_layer_forward.1} parent=35 // pred_check
          %p253 = pneg %p52
        $region38: #{ia_layer_forward.1} parent=35 // pred_check_branch
          %255 = sbr.rel (%p253) target = $region40
        $region39: #{ia_layer_forward.1} parent=35 // pred_region
          %s256 = smul.u32 2, %s26
          %p257 = scmp.lt.s32.totalorder %s25, 1
          %s258 = scalar_select %p257, %s25, 1
          %p259 = scmp.lt.s32.totalorder %s256, 1
          %s260 = scalar_select %p259, %s256, 1
          %s261 = smul.addr %s258, 8
          %s262 = sadd.s32 %s260, %s261
          %s263 = smul.addr %s262, 8
          %s264 = scalar_lea.vmem %s0, %s263
          %s265 = smul.u32 2, %s26
        $region40: #{ia_layer_forward.1} parent=35 // pred_fallthru
          _
        // Predicated region
        $region41: #{ia_layer_forward.1} parent=35 // pred_check
          %p266 = pneg %p80
        $region42: #{ia_layer_forward.1} parent=35 // pred_check_branch
          %268 = sbr.rel (%p266) target = $region44
        $region43: #{ia_layer_forward.1} parent=35 // pred_region
          %s269 = smul.u32 2, %s26
          %p270 = scmp.lt.s32.totalorder %s25, 1
          %s271 = scalar_select %p270, %s25, 1
          %p272 = scmp.lt.s32.totalorder %s269, 1
          %s273 = scalar_select %p272, %s269, 1
          %s274 = smul.addr %s271, 16
          %s275 = sadd.s32 %s273, %s274
          %s276 = smul.addr %s275, 8
          %s277 = scalar_lea.vmem %s1, %s276
          %s278 = smul.u32 2, %s26
        $region44: #{ia_layer_forward.1} parent=35 // pred_fallthru
          _
      $region36: #{ia_layer_forward.1} parent=5 // pred_fallthru
        _
      %p279 = scmp.le.s32.totalorder 1, %s18
      %p280 = scmp.lt.s32.totalorder %s18, 3
      %p281 = pnand %p279, %p280
      %p282 = pneg %p281
      // Predicated region
      $region45: #{ia_layer_forward.1} parent=5 // pred_check
        _
      $region46: #{ia_layer_forward.1} parent=5 // pred_check_branch
        %284 = sbr.rel (%p281) target = $region48
      $region47: #{ia_layer_forward.1} parent=5 // pred_region
        %s285 = ssub.s32 %s18, 1
        %s286 = smul.u32 2, %s28
        %p287 = scmp.lt.s32.totalorder %s27, 1
        %s288 = scalar_select %p287, %s27, 1
        %p289 = scmp.lt.s32.totalorder %s286, 1
        %s290 = scalar_select %p289, %s286, 1
        %s291 = smul.addr %s288, 8
        %s292 = sadd.s32 %s290, %s291
        %s293 = smul.addr %s292, 8
        %s294 = scalar_lea.vmem %s0, %s293
        %p295 = pneg %p58
        %p296 = pneg %p55
        %s297 = smul.u32 2, %s28
        %p298 = scmp.lt.s32.totalorder %s27, 1
        %s299 = scalar_select %p298, %s27, 1
        %p300 = scmp.lt.s32.totalorder %s297, 1
        %s301 = scalar_select %p300, %s297, 1
        %s302 = smul.addr %s299, 16
        %s303 = sadd.s32 %s301, %s302
        %s304 = smul.addr %s303, 8
        %s305 = scalar_lea.vmem %s1, %s304
        %p306 = pneg %p86
        %p307 = pneg %p83
        %p308 = pneg %p107
        %p309 = pneg %p104
        %p310 = pneg %p128
        %p311 = pneg %p125
        %p312 = pneg %p149
        %p313 = pneg %p146
        %p314 = pneg %p170
        %p315 = pneg %p167
        %p316 = pneg %p191
        %p317 = pneg %p188
        %p318 = pneg %p219
        %p319 = pneg %p216
        %s320 = sand.u32 %s206, 1
        %s321 = scalar_lea.sflag [#allocation4], %s320
        %s322 = sand.u32 %s206, 1
        %s323 = smul.addr %s322, 128
        %s324 = scalar_lea.vmem [#allocation3], %s323
        %s325 = smul.u32 2, %s28
        %p326 = scmp.lt.s32.totalorder %s27, 1
        %s327 = scalar_select %p326, %s27, 1
        %p328 = scmp.lt.s32.totalorder %s325, 1
        %s329 = scalar_select %p328, %s325, 1
        %s330 = smul.addr %s327, 8
        %s331 = sadd.s32 %s329, %s330
        %s332 = smul.addr %s331, 8
        %s333 = scalar_lea.vmem %s0, %s332
        %s334 = smul.u32 2, %s28
        %s335 = smul.u32 2, %s28
        %p336 = scmp.lt.s32.totalorder %s27, 1
        %s337 = scalar_select %p336, %s27, 1
        %p338 = scmp.lt.s32.totalorder %s335, 1
        %s339 = scalar_select %p338, %s335, 1
        %s340 = smul.addr %s337, 16
        %s341 = sadd.s32 %s339, %s340
        %s342 = smul.addr %s341, 8
        %s343 = scalar_lea.vmem %s1, %s342
        %s344 = smul.u32 2, %s28
        %s345 = smul.u32 2, %s28
        %v346 = vld [vmem:[%s333] sm:$0xff]
        %v347 = vld [vmem:[%s333 + $0x8] sm:$0xff]
        %v348 = vld [vmem:[%s333 + $0x10] sm:$0xff]
        %v349 = vld [vmem:[%s333 + $0x18] sm:$0xff]
        %v350 = vld [vmem:[%s333 + $0x20] sm:$0xff]
        %v351 = vld [vmem:[%s333 + $0x28] sm:$0xff]
        %v352 = vld [vmem:[%s333 + $0x30] sm:$0xff]
        %v353 = vld [vmem:[%s333 + $0x38] sm:$0xff]
        %v354 = vld [vmem:[%s343] sm:$0xff]
        %v355 = vld [vmem:[%s343 + $0x8] sm:$0xff]
        %v356 = vld [vmem:[%s343 + $0x10] sm:$0xff]
        %v357 = vld [vmem:[%s343 + $0x18] sm:$0xff]
        %v358 = vld [vmem:[%s343 + $0x20] sm:$0xff]
        %v359 = vld [vmem:[%s343 + $0x28] sm:$0xff]
        %v360 = vld [vmem:[%s343 + $0x30] sm:$0xff]
        %v361 = vld [vmem:[%s343 + $0x38] sm:$0xff]
        %v362 = vld [vmem:[%s343 + $0x40] sm:$0xff]
        %v363 = vld [vmem:[%s343 + $0x48] sm:$0xff]
        %v364 = vld [vmem:[%s343 + $0x50] sm:$0xff]
        %v365 = vld [vmem:[%s343 + $0x58] sm:$0xff]
        %v366 = vld [vmem:[%s343 + $0x60] sm:$0xff]
        %v367 = vld [vmem:[%s343 + $0x68] sm:$0xff]
        %v368 = vld [vmem:[%s343 + $0x70] sm:$0xff]
        %v369 = vld [vmem:[%s343 + $0x78] sm:$0xff]
        %v370 = vld [vmem:[%s2] sm:$0xff]
        %v371 = vld [vmem:[%s2 + $0x8] sm:$0xff]
        %v372 = vld [vmem:[%s2 + $0x10] sm:$0xff]
        %v373 = vld [vmem:[%s2 + $0x18] sm:$0xff]
        %v374 = vld [vmem:[%s2 + $0x20] sm:$0xff]
        %v375 = vld [vmem:[%s2 + $0x28] sm:$0xff]
        %v376 = vld [vmem:[%s2 + $0x30] sm:$0xff]
        %v377 = vld [vmem:[%s2 + $0x38] sm:$0xff]
        %v378 = vld [vmem:[%s2 + $0x40] sm:$0xff]
        %v379 = vld [vmem:[%s2 + $0x48] sm:$0xff]
        %v380 = vld [vmem:[%s3] sm:$0xff]
        %v381 = vld [vmem:[%s3 + $0x8] sm:$0xff]
        %v382 = vld [vmem:[%s3 + $0x10] sm:$0xff]
        %v383 = vld [vmem:[%s3 + $0x18] sm:$0xff]
        %v384 = vld [vmem:[%s3 + $0x20] sm:$0xff]
        %v385 = vld [vmem:[%s3 + $0x28] sm:$0xff]
        %v386 = vld [vmem:[%s3 + $0x30] sm:$0xff]
        %v387 = vld [vmem:[%s3 + $0x38] sm:$0xff]
        %v388 = vld [vmem:[%s3 + $0x40] sm:$0xff]
        %v389 = vld [vmem:[%s3 + $0x48] sm:$0xff]
        %391 = vset.pattern.permute.xlu0 0
        %392 = vperm.xlu0 %391, %v380
        %v393 = vpop.permute.xlu0 %392
        %396 = vset.pattern.permute.xlu0 0
        %397 = vperm.xlu0 %396, %v381
        %v398 = vpop.permute.xlu0 %397
        %401 = vset.pattern.permute.xlu0 0
        %402 = vperm.xlu0 %401, %v382
        %v403 = vpop.permute.xlu0 %402
        %406 = vset.pattern.permute.xlu0 0
        %407 = vperm.xlu0 %406, %v383
        %v408 = vpop.permute.xlu0 %407
        %411 = vset.pattern.permute.xlu0 0
        %412 = vperm.xlu0 %411, %v384
        %v413 = vpop.permute.xlu0 %412
        %416 = vset.pattern.permute.xlu0 0
        %417 = vperm.xlu0 %416, %v385
        %v418 = vpop.permute.xlu0 %417
        %421 = vset.pattern.permute.xlu0 0
        %422 = vperm.xlu0 %421, %v386
        %v423 = vpop.permute.xlu0 %422
        %426 = vset.pattern.permute.xlu0 0
        %427 = vperm.xlu0 %426, %v387
        %v428 = vpop.permute.xlu0 %427
        %431 = vset.pattern.permute.xlu0 0
        %432 = vperm.xlu0 %431, %v388
        %v433 = vpop.permute.xlu0 %432
        %436 = vset.pattern.permute.xlu0 0
        %437 = vperm.xlu0 %436, %v389
        %v438 = vpop.permute.xlu0 %437
        %vm440 = vcmask 261120
        %v442 = vsel %vm440, %v370, 0
        %v445 = vsel %vm440, %v371, 0
        %v448 = vsel %vm440, %v372, 0
        %v451 = vsel %vm440, %v373, 0
        %v454 = vsel %vm440, %v374, 0
        %v457 = vsel %vm440, %v375, 0
        %v460 = vsel %vm440, %v376, 0
        %v463 = vsel %vm440, %v377, 0
        %v466 = vsel %vm440, %v378, 0
        %v469 = vsel %vm440, %v379, 0
        %471 = vmatprep.subr.mxu0 0.0
        %472 = vmatpush1.msra.mxu0 0.0
        %473 = vmatprep.subr.mxu0 0.0
        %474 = vmatpush1.msra.mxu0 0.0
        %475 = vmatprep.subr.mxu0 0.0
        %476 = vmatpush1.msra.mxu0 0.0
        %477 = vmatprep.subr.mxu0 0.0
        %478 = vmatpush1.msra.mxu0 0.0
        %479 = vmatprep.subr.mxu0 0.0
        %480 = vmatpush1.msra.mxu0 0.0
        %481 = vmatprep.subr.mxu0 0.0
        %482 = vmatpush1.msra.mxu0 0.0
        %483 = vmatprep.subr.mxu0 0.0
        %484 = vmatpush1.msra.mxu0 0.0
        %485 = vmatprep.subr.mxu0 0.0
        %486 = vmatpush1.msra.mxu0 0.0
        %487 = vmatprep.subr.mxu0 0.0
        %488 = vmatpush1.msra.mxu0 0.0
        %489 = vmatprep.subr.mxu0 0.0
        %490 = vmatpush1.msra.mxu0 0.0
        %491 = vmatprep.subr.mxu0 0.0
        %492 = vmatpush1.msra.mxu0 0.0
        %493 = vmatprep.subr.mxu0 0.0
        %494 = vmatpush1.msra.mxu0 0.0
        %495 = vmatprep.subr.mxu0 %v353
        %496 = vmatpush1.msra.mxu0 %v352
        %497 = vmatprep.subr.mxu0 %v351
        %498 = vmatpush1.msra.mxu0 %v350
        %499 = vmatprep.subr.mxu0 %v349
        %500 = vmatpush1.msra.mxu0 %v348
        %501 = vmatprep.subr.mxu0 %v347
        %502 = vmatpush1.msra.mxu0 %v346
        %503 = vmatprep.subr.mxu0 0.0
        %504 = vmatpush2.msra.mxu0 0.0
        %505 = vmatprep.subr.mxu0 0.0
        %506 = vmatpush2.msra.mxu0 0.0
        %507 = vmatprep.subr.mxu0 0.0
        %508 = vmatpush2.msra.mxu0 0.0
        %509 = vmatprep.subr.mxu0 0.0
        %510 = vmatpush2.msra.mxu0 0.0
        %511 = vmatprep.subr.mxu0 0.0
        %512 = vmatpush2.msra.mxu0 0.0
        %513 = vmatprep.subr.mxu0 0.0
        %514 = vmatpush2.msra.mxu0 0.0
        %515 = vmatprep.subr.mxu0 0.0
        %516 = vmatpush2.msra.mxu0 0.0
        %517 = vmatprep.subr.mxu0 0.0
        %518 = vmatpush2.msra.mxu0 0.0
        %519 = vmatprep.subr.mxu0 0.0
        %520 = vmatpush2.msra.mxu0 0.0
        %521 = vmatprep.subr.mxu0 0.0
        %522 = vmatpush2.msra.mxu0 0.0
        %523 = vmatprep.subr.mxu0 0.0
        %524 = vmatpush2.msra.mxu0 0.0
        %525 = vmatprep.subr.mxu0 0.0
        %526 = vmatpush2.msra.mxu0 0.0
        %527 = vmatprep.subr.mxu0 0.0
        %528 = vmatpush2.msra.mxu0 0.0
        %529 = vmatprep.subr.mxu0 0.0
        %530 = vmatpush2.msra.mxu0 0.0
        %531 = vmatprep.subr.mxu0 0.0
        %532 = vmatpush2.msra.mxu0 0.0
        %533 = vmatprep.subr.mxu0 0.0
        %534 = vmatpush2.msra.mxu0 0.0
        %535 = vmatprep.mubr.f32.mxu0 0.0
        %536 = vmatmul.mubr.f32.gmra.mxu0 %v442
        %v537 = vpop.f32.mrf.mxu0
        %v538 = vadd.f32 %v393, %v537
        %v539 = vpop.f32.mrf.mxu0
        %v540 = vadd.f32 %v393, %v539
        %541 = vmatprep.mubr.f32.mxu0 0.0
        %542 = vmatmul.mubr.f32.gmra.mxu0 %v445
        %v543 = vpop.f32.mrf.mxu0
        %v544 = vadd.f32 %v398, %v543
        %v545 = vpop.f32.mrf.mxu0
        %v546 = vadd.f32 %v398, %v545
        %547 = vmatprep.mubr.f32.mxu0 0.0
        %548 = vmatmul.mubr.f32.gmra.mxu0 %v448
        %v549 = vpop.f32.mrf.mxu0
        %v550 = vadd.f32 %v403, %v549
        %v551 = vpop.f32.mrf.mxu0
        %v552 = vadd.f32 %v403, %v551
        %553 = vmatprep.mubr.f32.mxu0 0.0
        %554 = vmatmul.mubr.f32.gmra.mxu0 %v451
        %v555 = vpop.f32.mrf.mxu0
        %v556 = vadd.f32 %v408, %v555
        %v557 = vpop.f32.mrf.mxu0
        %v558 = vadd.f32 %v408, %v557
        %559 = vmatprep.mubr.f32.mxu0 0.0
        %560 = vmatmul.mubr.f32.gmra.mxu0 %v454
        %v561 = vpop.f32.mrf.mxu0
        %v562 = vadd.f32 %v413, %v561
        %v563 = vpop.f32.mrf.mxu0
        %v564 = vadd.f32 %v413, %v563
        %565 = vmatprep.mubr.f32.mxu0 0.0
        %566 = vmatmul.mubr.f32.gmra.mxu0 %v457
        %v567 = vpop.f32.mrf.mxu0
        %v568 = vadd.f32 %v418, %v567
        %v569 = vpop.f32.mrf.mxu0
        %v570 = vadd.f32 %v418, %v569
        %571 = vmatprep.mubr.f32.mxu0 0.0
        %572 = vmatmul.mubr.f32.gmra.mxu0 %v460
        %v573 = vpop.f32.mrf.mxu0
        %v574 = vadd.f32 %v423, %v573
        %v575 = vpop.f32.mrf.mxu0
        %v576 = vadd.f32 %v423, %v575
        %577 = vmatprep.mubr.f32.mxu0 0.0
        %578 = vmatmul.mubr.f32.gmra.mxu0 %v463
        %v579 = vpop.f32.mrf.mxu0
        %v580 = vadd.f32 %v428, %v579
        %v581 = vpop.f32.mrf.mxu0
        %v582 = vadd.f32 %v428, %v581
        %583 = vmatprep.mubr.f32.mxu0 0.0
        %584 = vmatmul.mubr.f32.gmra.mxu0 %v466
        %v585 = vpop.f32.mrf.mxu0
        %v586 = vadd.f32 %v433, %v585
        %v587 = vpop.f32.mrf.mxu0
        %v588 = vadd.f32 %v433, %v587
        %589 = vmatprep.mubr.f32.mxu0 0.0
        %590 = vmatmul.mubr.f32.gmra.mxu0 %v469
        %v591 = vpop.f32.mrf.mxu0
        %v592 = vadd.f32 %v438, %v591
        %v593 = vpop.f32.mrf.mxu0
        %v594 = vadd.f32 %v438, %v593
        %595 = vdwg.mxu0
        %v596 = vld [vmem:[%s4] sm:$0xff]
        %v597 = vld [vmem:[%s4 + $0x8] sm:$0xff]
        %vm598 = vcmask 523264
        %v600 = vsel %vm598, %v596, 0
        %v603 = vsel %vm598, %v597, 0
        %605 = vmatprep.subr.mxu0 0.0
        %606 = vmatpush1.msra.mxu0 0.0
        %607 = vmatprep.subr.mxu0 0.0
        %608 = vmatpush1.msra.mxu0 0.0
        %609 = vmatprep.subr.mxu0 0.0
        %610 = vmatpush1.msra.mxu0 0.0
        %611 = vmatprep.subr.mxu0 0.0
        %612 = vmatpush1.msra.mxu0 0.0
        %613 = vmatprep.subr.mxu0 0.0
        %614 = vmatpush1.msra.mxu0 0.0
        %615 = vmatprep.subr.mxu0 0.0
        %616 = vmatpush1.msra.mxu0 0.0
        %617 = vmatprep.subr.mxu0 0.0
        %618 = vmatpush1.msra.mxu0 0.0
        %619 = vmatprep.subr.mxu0 0.0
        %620 = vmatpush1.msra.mxu0 0.0
        %621 = vmatprep.subr.mxu0 %v369
        %622 = vmatpush1.msra.mxu0 %v368
        %623 = vmatprep.subr.mxu0 %v367
        %624 = vmatpush1.msra.mxu0 %v366
        %625 = vmatprep.subr.mxu0 %v365
        %626 = vmatpush1.msra.mxu0 %v364
        %627 = vmatprep.subr.mxu0 %v363
        %628 = vmatpush1.msra.mxu0 %v362
        %629 = vmatprep.subr.mxu0 %v361
        %630 = vmatpush1.msra.mxu0 %v360
        %631 = vmatprep.subr.mxu0 %v359
        %632 = vmatpush1.msra.mxu0 %v358
        %633 = vmatprep.subr.mxu0 %v357
        %634 = vmatpush1.msra.mxu0 %v356
        %635 = vmatprep.subr.mxu0 %v355
        %636 = vmatpush1.msra.mxu0 %v354
        %637 = vmatprep.subr.mxu0 0.0
        %638 = vmatpush2.msra.mxu0 0.0
        %639 = vmatprep.subr.mxu0 0.0
        %640 = vmatpush2.msra.mxu0 0.0
        %641 = vmatprep.subr.mxu0 0.0
        %642 = vmatpush2.msra.mxu0 0.0
        %643 = vmatprep.subr.mxu0 0.0
        %644 = vmatpush2.msra.mxu0 0.0
        %645 = vmatprep.subr.mxu0 0.0
        %646 = vmatpush2.msra.mxu0 0.0
        %647 = vmatprep.subr.mxu0 0.0
        %648 = vmatpush2.msra.mxu0 0.0
        %649 = vmatprep.subr.mxu0 0.0
        %650 = vmatpush2.msra.mxu0 0.0
        %651 = vmatprep.subr.mxu0 0.0
        %652 = vmatpush2.msra.mxu0 0.0
        %653 = vmatprep.subr.mxu0 0.0
        %654 = vmatpush2.msra.mxu0 0.0
        %655 = vmatprep.subr.mxu0 0.0
        %656 = vmatpush2.msra.mxu0 0.0
        %657 = vmatprep.subr.mxu0 0.0
        %658 = vmatpush2.msra.mxu0 0.0
        %659 = vmatprep.subr.mxu0 0.0
        %660 = vmatpush2.msra.mxu0 0.0
        %661 = vmatprep.subr.mxu0 0.0
        %662 = vmatpush2.msra.mxu0 0.0
        %663 = vmatprep.subr.mxu0 0.0
        %664 = vmatpush2.msra.mxu0 0.0
        %665 = vmatprep.subr.mxu0 0.0
        %666 = vmatpush2.msra.mxu0 0.0
        %667 = vmatprep.subr.mxu0 0.0
        %668 = vmatpush2.msra.mxu0 0.0
        %669 = vmatprep.mubr.f32.mxu0 0.0
        %670 = vmatmul.mubr.f32.gmra.mxu0 %v600
        %v671 = vpop.f32.mrf.mxu0
        %v672 = vadd.f32 0.0, %v671
        %v673 = vpop.f32.mrf.mxu0
        %v674 = vadd.f32 0.0, %v673
        %675 = vmatprep.mubr.f32.mxu0 0.0
        %676 = vmatmul.mubr.f32.gmra.mxu0 %v603
        %v677 = vpop.f32.mrf.mxu0
        %v678 = vadd.f32 0.0, %v677
        %v679 = vpop.f32.mrf.mxu0
        %v680 = vadd.f32 0.0, %v679
        %681 = vdwg.mxu0
        %v682 = vadd.f32 %v586, %v672
        %v683 = vadd.f32 %v588, %v674
        %v684 = vadd.f32 %v592, %v678
        %v685 = vadd.f32 %v594, %v680
        %v686 = vtanh.pop %v682
        %v687 = vtanh.pop %v683
        %v688 = vtanh.pop %v684
        %v689 = vtanh.pop %v685
        %v690 = vld [vmem:[%s5] sm:$0x1]
        %v691 = vld [vmem:[#allocation2] sm:$0x1]
        %693 = vset.pattern.permute.xlu0 0
        %694 = vperm.xlu0 %693, %v691
        %v695 = vpop.permute.xlu0 %694
        %v697 = vlaneseq
        %v698 = vshrl.u32 %v697, 7
        %v699 = vsub.s32 0, %v698
        %v700 = vrot.slane %v695, %v699
        %vm701 = vcmask 130048
        %v703 = vsel %vm701, %v690, 0
        %705 = vmatprep.subr.mxu0 0.0
        %706 = vmatpush1.msra.mxu0 0.0
        %707 = vmatprep.subr.mxu0 0.0
        %708 = vmatpush1.msra.mxu0 0.0
        %709 = vmatprep.subr.mxu0 0.0
        %710 = vmatpush1.msra.mxu0 0.0
        %711 = vmatprep.subr.mxu0 0.0
        %712 = vmatpush1.msra.mxu0 0.0
        %713 = vmatprep.subr.mxu0 0.0
        %714 = vmatpush1.msra.mxu0 0.0
        %715 = vmatprep.subr.mxu0 0.0
        %716 = vmatpush1.msra.mxu0 0.0
        %717 = vmatprep.subr.mxu0 0.0
        %718 = vmatpush1.msra.mxu0 0.0
        %719 = vmatprep.subr.mxu0 0.0
        %720 = vmatpush1.msra.mxu0 0.0
        %721 = vmatprep.subr.mxu0 0.0
        %722 = vmatpush1.msra.mxu0 0.0
        %723 = vmatprep.subr.mxu0 0.0
        %724 = vmatpush1.msra.mxu0 0.0
        %725 = vmatprep.subr.mxu0 0.0
        %726 = vmatpush1.msra.mxu0 0.0
        %727 = vmatprep.subr.mxu0 0.0
        %728 = vmatpush1.msra.mxu0 0.0
        %729 = vmatprep.subr.mxu0 0.0
        %730 = vmatpush1.msra.mxu0 0.0
        %731 = vmatprep.subr.mxu0 0.0
        %732 = vmatpush1.msra.mxu0 0.0
        %733 = vmatprep.subr.mxu0 %v689
        %734 = vmatpush1.msra.mxu0 %v688
        %735 = vmatprep.subr.mxu0 %v687
        %736 = vmatpush1.msra.mxu0 %v686
        %737 = vmatprep.subr.mxu0 0.0
        %738 = vmatpush2.msra.mxu0 0.0
        %739 = vmatprep.subr.mxu0 0.0
        %740 = vmatpush2.msra.mxu0 0.0
        %741 = vmatprep.subr.mxu0 0.0
        %742 = vmatpush2.msra.mxu0 0.0
        %743 = vmatprep.subr.mxu0 0.0
        %744 = vmatpush2.msra.mxu0 0.0
        %745 = vmatprep.subr.mxu0 0.0
        %746 = vmatpush2.msra.mxu0 0.0
        %747 = vmatprep.subr.mxu0 0.0
        %748 = vmatpush2.msra.mxu0 0.0
        %749 = vmatprep.subr.mxu0 0.0
        %750 = vmatpush2.msra.mxu0 0.0
        %751 = vmatprep.subr.mxu0 0.0
        %752 = vmatpush2.msra.mxu0 0.0
        %753 = vmatprep.subr.mxu0 0.0
        %754 = vmatpush2.msra.mxu0 0.0
        %755 = vmatprep.subr.mxu0 0.0
        %756 = vmatpush2.msra.mxu0 0.0
        %757 = vmatprep.subr.mxu0 0.0
        %758 = vmatpush2.msra.mxu0 0.0
        %759 = vmatprep.subr.mxu0 0.0
        %760 = vmatpush2.msra.mxu0 0.0
        %761 = vmatprep.subr.mxu0 0.0
        %762 = vmatpush2.msra.mxu0 0.0
        %763 = vmatprep.subr.mxu0 0.0
        %764 = vmatpush2.msra.mxu0 0.0
        %765 = vmatprep.subr.mxu0 0.0
        %766 = vmatpush2.msra.mxu0 0.0
        %767 = vmatprep.subr.mxu0 0.0
        %768 = vmatpush2.msra.mxu0 0.0
        %769 = vmatprep.mubr.f32.mxu0 0.0
        %770 = vmatmul.mubr.f32.gmra.mxu0 %v703
        %v771 = vpop.f32.mrf.mxu0
        %v772 = vadd.f32 %v700, %v771
        %v773 = vpop.f32.mrf.mxu0
        %v774 = vadd.f32 %v700, %v773
        %775 = vdwg.mxu0
        %v776 = vxor.u32 %v772, 2147483648
        %v777 = vxor.u32 %v774, 2147483648
        %v778 = vmul.f32 %v776, 1.442695
        %v779 = vpow.pop %v778
        %v780 = vmul.f32 %v777, 1.442695
        %v781 = vpow.pop %v780
        %v782 = vadd.f32 %v779, 1.0
        %v783 = vadd.f32 %v781, 1.0
        %v784 = vrcp.pop %v782
        %v785 = vmul.f32 1.0, %v784
        %v786 = vrcp.pop %v783
        %v787 = vmul.f32 1.0, %v786
        %v788 = vmax.f32 %v538, 0.0
        %v789 = vmax.f32 %v540, 0.0
        %v790 = vmax.f32 %v544, 0.0
        %v791 = vmax.f32 %v546, 0.0
        %v792 = vmax.f32 %v550, 0.0
        %v793 = vmax.f32 %v552, 0.0
        %v794 = vmax.f32 %v556, 0.0
        %v795 = vmax.f32 %v558, 0.0
        %v796 = vmax.f32 %v562, 0.0
        %v797 = vmax.f32 %v564, 0.0
        %v798 = vmax.f32 %v568, 0.0
        %v799 = vmax.f32 %v570, 0.0
        %v800 = vmax.f32 %v574, 0.0
        %v801 = vmax.f32 %v576, 0.0
        %v802 = vmax.f32 %v580, 0.0
        %v803 = vmax.f32 %v582, 0.0
        %v804 = vlaneseq
        %v805 = vshrl.u32 %v804, 7
        %v806 = vsub.s32 0, %v805
        %v807 = vrot.slane %v785, %v806
        %v808 = vlaneseq
        %v809 = vshrl.u32 %v808, 7
        %v810 = vsub.s32 0, %v809
        %v811 = vrot.slane %v787, %v810
        %v812 = vmul.f32 %v788, %v807
        %v813 = vmul.f32 %v789, %v811
        %v814 = vmul.f32 %v790, %v807
        %v815 = vmul.f32 %v791, %v811
        %v816 = vmul.f32 %v792, %v807
        %v817 = vmul.f32 %v793, %v811
        %v818 = vmul.f32 %v794, %v807
        %v819 = vmul.f32 %v795, %v811
        %v820 = vmul.f32 %v796, %v807
        %v821 = vmul.f32 %v797, %v811
        %v822 = vmul.f32 %v798, %v807
        %v823 = vmul.f32 %v799, %v811
        %v824 = vmul.f32 %v800, %v807
        %v825 = vmul.f32 %v801, %v811
        %v826 = vmul.f32 %v802, %v807
        %v827 = vmul.f32 %v803, %v811
        %828 = vst [vmem:[%s324] sm:$0xff] %v812
        %829 = vst [vmem:[%s324 + $0x8] sm:$0xff] %v813
        %830 = vst [vmem:[%s324 + $0x10] sm:$0xff] %v814
        %831 = vst [vmem:[%s324 + $0x18] sm:$0xff] %v815
        %832 = vst [vmem:[%s324 + $0x20] sm:$0xff] %v816
        %833 = vst [vmem:[%s324 + $0x28] sm:$0xff] %v817
        %834 = vst [vmem:[%s324 + $0x30] sm:$0xff] %v818
        %835 = vst [vmem:[%s324 + $0x38] sm:$0xff] %v819
        %836 = vst [vmem:[%s324 + $0x40] sm:$0xff] %v820
        %837 = vst [vmem:[%s324 + $0x48] sm:$0xff] %v821
        %838 = vst [vmem:[%s324 + $0x50] sm:$0xff] %v822
        %839 = vst [vmem:[%s324 + $0x58] sm:$0xff] %v823
        %840 = vst [vmem:[%s324 + $0x60] sm:$0xff] %v824
        %841 = vst [vmem:[%s324 + $0x68] sm:$0xff] %v825
        %842 = vst [vmem:[%s324 + $0x70] sm:$0xff] %v826
        %843 = vst [vmem:[%s324 + $0x78] sm:$0xff] %v827
        %s844 = sand.u32 %s206, 1
        %s845 = scalar_lea.sflag [#allocation4], %s844
        %s846 = sand.u32 %s206, 1
        %s847 = smul.addr %s846, 128
        %s848 = scalar_lea.vmem [#allocation3], %s847
        // Predicated region
        $region49: #{ia_layer_forward.1} parent=47 // pred_check
          %p849 = pneg %p216
        $region50: #{ia_layer_forward.1} parent=47 // pred_check_branch
          %851 = sbr.rel (%p849) target = $region52
        $region51: #{ia_layer_forward.1} parent=47 // pred_region
          %s852 = smul.u32 2, %s28
          %s854 = ssub.s32 2048, 2048
          %855 = vsyncadd %s845, %s854
          %s856 = smul.addr %s27, 16
          %s857 = sadd.s32 %s852, %s856
          %s858 = smul.addr %s857, 128
          %s859 = scalar_lea.hbm %s7, %s858
          %s860 = sshll.u32 %s848, 4
          %s861 = int_to_ptr.vmem [resolvable:$true] %s860
          %866 = dma.vmem_to_hbm [thread:$0]  %s861, 2048, %s859, %s845, 256, 256, 16
        $region52: #{ia_layer_forward.1} parent=47 // pred_fallthru
          _
      $region48: #{ia_layer_forward.1} parent=5 // pred_fallthru
        _
      %p867 = scmp.le.s32.totalorder 2, %s18
      // Predicated region
      $region53: #{ia_layer_forward.1} parent=5 // pred_check
        %p868 = pneg %p867
      $region54: #{ia_layer_forward.1} parent=5 // pred_check_branch
        %870 = sbr.rel (%p868) target = $region56
      $region55: #{ia_layer_forward.1} parent=5 // pred_region
        %s871 = ssub.s32 %s18, 2
        // Predicated region
        $region57: #{ia_layer_forward.1} parent=55 // pred_check
          %p872 = pneg %p222
        $region58: #{ia_layer_forward.1} parent=55 // pred_check_branch
          %874 = sbr.rel (%p872) target = $region60
        $region59: #{ia_layer_forward.1} parent=55 // pred_region
          %s875 = sand.u32 %s207, 1
          %s876 = scalar_lea.sflag [#allocation4], %s875
          %s877 = sand.u32 %s207, 1
          %s878 = smul.addr %s877, 128
          %s879 = scalar_lea.vmem [#allocation3], %s878
          %880 = dma.done %s876, 2048
        $region60: #{ia_layer_forward.1} parent=55 // pred_fallthru
          _
      $region56: #{ia_layer_forward.1} parent=5 // pred_fallthru
        _
    $region6: #{ia_layer_forward.1} parent=1 // loop_footer
      %s22 = sadd.s32 1, %s18
    $region7: #{ia_layer_forward.1} parent=1 // loop_footer_branch
      %17 = sbr.rel target = $region3
    $region8: #{ia_layer_forward.1} parent=1 // loop_exit
      _
    %881 = vsyncpa [#allocation4], 1
    %s882 = scalar_lea.sflag [#allocation4], 1
    %883 = vsyncpa %s882, 1

</llo_original>
